<compile_context>
chip_gen: v7x
topology: tpu7x:2x2x1
jax: 0.10.0
libtpu: 0.0.40
codegen_flags: <defaults>
</compile_context>

<pallas_src>
import functools

import numpy as np
import jax
import jax.numpy as jnp
from jax import lax
from jax.experimental import pallas as pl
from jax.experimental.pallas import tpu as pltpu


def _tv_kernel(x_ref, out_ref, *, m_total, tm, need_mask):
    """Per-tile TV partial sums.

    x_ref  : (Nx, Ny, TM) f32 tile (lanes = flattened trailing dims incl. re/im)
    out_ref: (1, 1, TM)   f32 per-lane partial sums for this tile
    """
    nx, ny, bm = x_ref.shape
    x = x_ref[...]

    if need_mask:
        # The last tile may extend past M: OOB lanes hold undefined data.
        # Zero them (select, so NaN/Inf-safe) so their diffs contribute 0.
        lane = lax.broadcasted_iota(jnp.int32, x.shape, 2) + pl.program_id(0) * tm
        x = jnp.where(lane < m_total, x, 0.0)

    # ---- forward differences along axis 0 (major axis: cheap vreg slices) ----
    if nx > 1:
        p0 = jnp.sum(jnp.abs(x[1:, :, :] - x[:-1, :, :]), axis=0)   # (Ny, TM)
    else:
        p0 = jnp.zeros((ny, bm), jnp.float32)

    # ---- forward differences along axis 1 (sublane axis: XLU roll + mask) ----
    if ny > 1:
        nxt = pltpu.roll(x, ny - 1, 1)           # nxt[:, j, :] = x[:, (j+1)%Ny, :]
        row = lax.broadcasted_iota(jnp.int32, x.shape, 1)
        d1 = jnp.where(row < ny - 1, jnp.abs(nxt - x), 0.0)   # zero the wrap row
        p1 = jnp.sum(d1, axis=0)                               # (Ny, TM)
    else:
        p1 = jnp.zeros((ny, bm), jnp.float32)

    # Single cross-sublane reduce per tile; lane-dense store.
    out_ref[...] = jnp.sum(p0 + p1, axis=0, keepdims=True).reshape(1, 1, bm)


def _interleaved_f32_view(x_complex):
    """f32 view of a complex array with re/im interleaved on a new last axis."""
    if x_complex.dtype == jnp.complex64:
        try:
            # Free bitcast: c64[...] -> f32[..., 2]; no HBM copy when fused.
            return lax.bitcast_convert_type(x_complex, jnp.float32)
        except Exception:
            pass  # bitcast of complex unsupported -> materializing fallback
    return jnp.stack(
        [jnp.real(x_complex), jnp.imag(x_complex)], axis=-1
    ).astype(jnp.float32)


def tv_loss(x_complex, *, target_block_bytes=2 * 1024 * 1024):
    """Pallas implementation of TVLoss.forward (matches PyTorch semantics)."""
    shape = x_complex.shape
    nx, ny = int(shape[0]), int(shape[1])

    # PyTorch denominator: (Nx-1)(Ny-1); the trailing .mean() of the >3-D
    # branch folds into an extra product over shape[2:-1].
    denom = (nx - 1) * (ny - 1)
    if x_complex.ndim > 3:
        denom *= int(np.prod(shape[2:-1]))
    inv_denom = float("inf") if denom == 0 else 1.0 / denom  # mirrors torch x/0

    xf = _interleaved_f32_view(x_complex).reshape(nx, ny, -1)
    m_total = int(xf.shape[2])

    # Lane-tile: keep a single input block around ~2 MiB (multiple of 128).
    tm_target = max(128, (target_block_bytes // (4 * nx * ny)) // 128 * 128)
    if m_total <= tm_target:
        tm = m_total          # single full-width block (always a legal shape)
    else:
        tm = tm_target        # multiple of 128 -> aligned lane tiles
    num_tiles = -(-m_total // tm)
    need_mask = (m_total % tm) != 0

    kernel = functools.partial(
        _tv_kernel, m_total=m_total, tm=tm, need_mask=need_mask)

    partials = pl.pallas_call(
        kernel,
        out_shape=jax.ShapeDtypeStruct((num_tiles, 1, tm), jnp.float32),
        grid=(num_tiles,),
        in_specs=[pl.BlockSpec((nx, ny, tm), lambda m: (0, 0, m))],
        out_specs=pl.BlockSpec((1, 1, tm), lambda m: (m, 0, 0)),
        compiler_params=pltpu.CompilerParams(
            dimension_semantics=("parallel",),
            vmem_limit_bytes=32 * 1024 * 1024,
        ),
        cost_estimate=pl.CostEstimate(
            flops=6 * nx * ny * m_total,
            transcendentals=0,
            bytes_accessed=4 * nx * ny * m_total + 4 * num_tiles * tm,
        ),
    )(xf)

    # Tiny final reduction + normalization in plain XLA.
    return jnp.sum(partials) * jnp.float32(inv_denom)


def tv_loss_ref_np(x_complex):
    """float64 NumPy mirror of the PyTorch forward (for validation)."""
    xc = np.asarray(x_complex).astype(np.complex128)
    nx, ny = xc.shape[0], xc.shape[1]
    total = 0.0
    for x in (xc.real, xc.imag):
        if x.ndim > 3:
            t = (np.sum(np.abs(x[1:] - x[: nx - 1]), axis=(0, 1, -1))
                 + np.sum(np.abs(x[:, 1:] - x[:, : ny - 1]), axis=(0, 1, -1))
                 ) / ((nx - 1) * (ny - 1))
            total += t.mean()
        else:
            total += (np.sum(np.abs(x[1:] - x[: nx - 1]))
                      + np.sum(np.abs(x[:, 1:] - x[:, : ny - 1]))
                      ) / ((nx - 1) * (ny - 1))
    return total


if __name__ == "__main__":
    key = jax.random.PRNGKey(0)
    k1, k2, k3, k4 = jax.random.split(key, 4)

    # Case 1: small 4-D input, single lane tile.
    shape1 = (8, 8, 4, 16)          # [Nx, Ny, H, W]
    xc1 = (jax.random.normal(k1, shape1, jnp.float32)
           + 1j * jax.random.normal(k2, shape1, jnp.float32)).astype(jnp.complex64)

    # Case 2: forces a multi-tile grid with a partial (masked) last tile,
    # exercising the pipelined "parallel" path: M = 2*4*40 = 320 lanes,
    # lane tile forced to 128 -> 3 tiles, last one partial.
    shape2 = (7, 8, 4, 40)
    xc2 = (jax.random.normal(k3, shape2, jnp.float32)
           + 1j * jax.random.normal(k4, shape2, jnp.float32)).astype(jnp.complex64)

    out1 = jax.block_until_ready(tv_loss(xc1))
    out2 = jax.block_until_ready(tv_loss(xc2, target_block_bytes=4 * 7 * 8 * 128))

    ref1 = tv_loss_ref_np(xc1)
    ref2 = tv_loss_ref_np(xc2)

    if not np.allclose(np.asarray(out1), ref1, rtol=1e-4, atol=1e-4):
        raise AssertionError(f"case1 mismatch: pallas={out1} ref={ref1}")
    if not np.allclose(np.asarray(out2), ref2, rtol=1e-4, atol=1e-4):
        raise AssertionError(f"case2 mismatch: pallas={out2} ref={ref2}")
    print("KERNEL_OK")
</pallas_src>

<mosaic_0001>
module attributes {stable_mosaic.version = 11 : i64} {
  func.func @_tv_kernel(%arg0: i32, %arg1: memref<8x8x128xf32, #tpu.memory_space<vmem>>, %arg2: memref<1x1x128xf32, #tpu.memory_space<vmem>>) attributes {dimension_semantics = [#tpu.dimension_semantics<parallel>], iteration_bounds = array<i64: 1>, scalar_prefetch = 0 : i64, scratch_operands = 0 : i64, tpu.core_type = #tpu.core_type<tc>, window_params = [{transform_indices = @transform_0, window_bounds = array<i64: 8, 8, 128>}, {transform_indices = @transform_1, window_bounds = array<i64: 1, 1, 128>}]} {
    %c0 = arith.constant 0 : index
    %c0_0 = arith.constant 0 : index
    %c0_1 = arith.constant 0 : index
    %0 = vector.load %arg1[%c0, %c0_0, %c0_1] : memref<8x8x128xf32, #tpu.memory_space<vmem>>, vector<8x8x128xf32>
    %1 = vector.extract_strided_slice %0 {offsets = [1, 0, 0], sizes = [7, 8, 128], strides = [1, 1, 1]} : vector<8x8x128xf32> to vector<7x8x128xf32>
    %2 = vector.extract_strided_slice %0 {offsets = [0, 0, 0], sizes = [7, 8, 128], strides = [1, 1, 1]} : vector<8x8x128xf32> to vector<7x8x128xf32>
    %3 = arith.subf %1, %2 : vector<7x8x128xf32>
    %4 = math.absf %3 : vector<7x8x128xf32>
    %cst = arith.constant dense<0.000000e+00> : vector<8x128xf32>
    %5 = vector.multi_reduction <add>, %4, %cst [0] : vector<7x8x128xf32> to vector<8x128xf32>
    %c7_i32 = arith.constant 7 : i32
    %6 = tpu.dynamic_rotate %0 by %c7_i32 dim 1 : vector<8x8x128xf32>, i32 -> vector<8x8x128xf32>
    %7 = tpu.iota {dimensions = array<i32: 1>} : vector<8x8x128xi32>
    %c7_i32_2 = arith.constant 7 : i32
    %8 = vector.broadcast %c7_i32_2 : i32 to vector<8x8x128xi32>
    %9 = arith.cmpi slt, %7, %8 : vector<8x8x128xi32>
    %10 = arith.subf %6, %0 : vector<8x8x128xf32>
    %11 = math.absf %10 : vector<8x8x128xf32>
    %cst_3 = arith.constant 0.000000e+00 : f32
    %12 = vector.broadcast %cst_3 : f32 to vector<8x8x128xf32>
    %13 = arith.select %9, %11, %12 : vector<8x8x128xi1>, vector<8x8x128xf32>
    %cst_4 = arith.constant dense<0.000000e+00> : vector<8x128xf32>
    %14 = vector.multi_reduction <add>, %13, %cst_4 [0] : vector<8x8x128xf32> to vector<8x128xf32>
    %15 = arith.addf %5, %14 : vector<8x128xf32>
    %cst_5 = arith.constant dense<0.000000e+00> : vector<128xf32>
    %16 = vector.multi_reduction <add>, %15, %cst_5 [0] : vector<8x128xf32> to vector<128xf32>
    %17 = vector.shape_cast %16 : vector<128xf32> to vector<1x128xf32>
    %18 = vector.shape_cast %17 : vector<1x128xf32> to vector<1x1x128xf32>
    %c0_6 = arith.constant 0 : index
    %c0_7 = arith.constant 0 : index
    %c0_8 = arith.constant 0 : index
    %19 = vector.load %arg2[%c0_6, %c0_7, %c0_8] : memref<1x1x128xf32, #tpu.memory_space<vmem>>, vector<1x1x128xf32>
    tpu.vector_store %arg2[%c0_6, %c0_7, %c0_8], %18 {strides = array<i32>} : memref<1x1x128xf32, #tpu.memory_space<vmem>>, vector<1x1x128xf32>,
    return
  }
  func.func @transform_0(%arg0: i32) -> (i32, i32, i32) {
    %c0_i32 = arith.constant 0 : i32
    %c0_i32_0 = arith.constant 0 : i32
    %c0_i32_1 = arith.constant 0 : i32
    return %c0_i32, %c0_i32_0, %arg0 : i32, i32, i32
  }
  func.func @transform_1(%arg0: i32) -> (i32, i32, i32) {
    %c0_i32 = arith.constant 0 : i32
    %c0_i32_0 = arith.constant 0 : i32
    %c0_i32_1 = arith.constant 0 : i32
    return %arg0, %c0_i32, %c0_i32_0 : i32, i32, i32
  }
}

</mosaic_0001>

<llo_original>
// kernel: tpu_custom_call.1
$region0: #{tpu_custom_call.1}
  #allocation0 [shape = 'u32[]', space=smem, size = 0x4, offset = 0x4, fixed_abs, tag = 'smem constant byte address 0x4 - core index']
  #allocation1 [shape = 'u32[144,128]{1,0:T(1,128)}', space=vmem, size = 0x12000, scoped, tag = 'internal scratch']
  %s0 = inlined_call_operand.hbm [shape: f32[8,8,128], index: 0, kind: input, shape index: {}]
  %s1 = inlined_call_operand.hbm [shape: f32[1,1,128], index: 1, kind: output, shape index: {}]
  %s2 = sld [smem:[#allocation0]]
  $region18: #{tpu_custom_call.1} parent=0
    _
  %s4 = ssub.s32 1, %s2
  %s5 = scalar_select 0, %s4, %s2
  $region1: #{tpu_custom_call.1} parent=0
    #allocation2 [shape = 'u8[32768]{0}', space=vmem, size = 0x8000, scoped, tag = 'input window, operand 0, single buffered']
    #allocation3 [shape = 's32[1]{0}', space=sflag, size = 0x4, scoped, tag = 'scoped memory for tpu_custom_call.1']
    #allocation4 [shape = 's32[1]{0}', space=sflag, size = 0x4, scoped, tag = 'scoped memory for tpu_custom_call.1']
    #allocation5 [shape = 'u8[512]{0}', space=vmem, size = 0x400, scoped, tag = 'output window, operand 0, single buffered']
    %6 = vsyncpa [#allocation3], 0
    %7 = vsyncpa [#allocation4], 0
    // Predicated region
    $region2: #{tpu_custom_call.1} parent=1 // pred_check
      _
    $region3: #{tpu_custom_call.1} parent=1 // pred_check_branch
      %9 = sbr.rel (0) target = $region5
    $region4: #{tpu_custom_call.1} parent=1 // pred_region
      %s11 = ssub.s32 1024, 1024
      %12 = vsyncadd [#allocation3], %s11
      %s13 = sshll.u32 [#allocation2], 4
      %s14 = int_to_ptr.vmem [resolvable:$true] %s13
      %19 = dma.hbm_to_vmem [thread:$0]  %s0, 1024, %s14, [#allocation3], 128, 128, 8
    $region5: #{tpu_custom_call.1} parent=1 // pred_fallthru
      _
    // Predicated region
    $region6: #{tpu_custom_call.1} parent=1 // pred_check
      _
    $region7: #{tpu_custom_call.1} parent=1 // pred_check_branch
      %21 = sbr.rel (0) target = $region9
    $region8: #{tpu_custom_call.1} parent=1 // pred_region
      %22 = dma.done [#allocation3], 1024
    $region9: #{tpu_custom_call.1} parent=1 // pred_fallthru
      _
    %v23 = vld [vmem:[#allocation2] sm:$0xff]
    %v24 = vld [vmem:[#allocation2 + $0x8] sm:$0xff]
    %v25 = vld [vmem:[#allocation2 + $0x10] sm:$0xff]
    %v26 = vld [vmem:[#allocation2 + $0x18] sm:$0xff]
    %v27 = vld [vmem:[#allocation2 + $0x20] sm:$0xff]
    %v28 = vld [vmem:[#allocation2 + $0x28] sm:$0xff]
    %v29 = vld [vmem:[#allocation2 + $0x30] sm:$0xff]
    %v30 = vld [vmem:[#allocation2 + $0x38] sm:$0xff]
    %v31 = vsub.f32 %v24, %v23
    %v32 = vsub.f32 %v25, %v24
    %v33 = vsub.f32 %v26, %v25
    %v34 = vsub.f32 %v27, %v26
    %v35 = vsub.f32 %v28, %v27
    %v36 = vsub.f32 %v29, %v28
    %v37 = vsub.f32 %v30, %v29
    %v38 = vand.u32 2147483647, %v31
    %v39 = vand.u32 2147483647, %v32
    %v40 = vand.u32 2147483647, %v33
    %v41 = vand.u32 2147483647, %v34
    %v42 = vand.u32 2147483647, %v35
    %v43 = vand.u32 2147483647, %v36
    %v44 = vand.u32 2147483647, %v37
    %v45 = vadd.f32 %v38, %v39
    %v46 = vadd.f32 %v45, %v40
    %v47 = vadd.f32 %v46, %v41
    %v48 = vadd.f32 %v47, %v42
    %v49 = vadd.f32 %v48, %v43
    %v50 = vadd.f32 %v49, %v44
    %v51 = vrot.slane %v23, 1
    %v52 = vrot.slane %v24, 1
    %v53 = vrot.slane %v25, 1
    %v54 = vrot.slane %v26, 1
    %v55 = vrot.slane %v27, 1
    %v56 = vrot.slane %v28, 1
    %v57 = vrot.slane %v29, 1
    %v58 = vrot.slane %v30, 1
    %v59 = vlaneseq
    %v60 = vshrl.u32 %v59, 7
    %vm61 = vcmp.lt.s32.totalorder %v60, 7
    %v62 = vsub.f32 %v51, %v23
    %v63 = vsub.f32 %v52, %v24
    %v64 = vsub.f32 %v53, %v25
    %v65 = vsub.f32 %v54, %v26
    %v66 = vsub.f32 %v55, %v27
    %v67 = vsub.f32 %v56, %v28
    %v68 = vsub.f32 %v57, %v29
    %v69 = vsub.f32 %v58, %v30
    %v70 = vand.u32 2147483647, %v62
    %v71 = vand.u32 2147483647, %v63
    %v72 = vand.u32 2147483647, %v64
    %v73 = vand.u32 2147483647, %v65
    %v74 = vand.u32 2147483647, %v66
    %v75 = vand.u32 2147483647, %v67
    %v76 = vand.u32 2147483647, %v68
    %v77 = vand.u32 2147483647, %v69
    %v78 = vsel %vm61, %v70, 0.0
    %v79 = vsel %vm61, %v71, 0.0
    %v80 = vsel %vm61, %v72, 0.0
    %v81 = vsel %vm61, %v73, 0.0
    %v82 = vsel %vm61, %v74, 0.0
    %v83 = vsel %vm61, %v75, 0.0
    %v84 = vsel %vm61, %v76, 0.0
    %v85 = vsel %vm61, %v77, 0.0
    %v86 = vadd.f32 %v78, %v79
    %v87 = vadd.f32 %v86, %v80
    %v88 = vadd.f32 %v87, %v81
    %v89 = vadd.f32 %v88, %v82
    %v90 = vadd.f32 %v89, %v83
    %v91 = vadd.f32 %v90, %v84
    %v92 = vadd.f32 %v91, %v85
    %v93 = vadd.f32 %v50, %v92
    %v94 = vrot.slane %v93, 4
    %v95 = vadd.f32 %v93, %v94
    %v96 = vrot.slane %v95, 2
    %v97 = vadd.f32 %v95, %v96
    %v98 = vrot.slane %v97, 1
    %v99 = vadd.f32 %v97, %v98
    %100 = vst [vmem:[#allocation5] sm:$0x1] %v99
    // Predicated region
    $region10: #{tpu_custom_call.1} parent=1 // pred_check
      _
    $region11: #{tpu_custom_call.1} parent=1 // pred_check_branch
      %102 = sbr.rel (0) target = $region13
    $region12: #{tpu_custom_call.1} parent=1 // pred_region
      %s104 = ssub.s32 16, 16
      %105 = vsyncadd [#allocation4], %s104
      %s107 = sshll.u32 [#allocation5], 4
      %s108 = int_to_ptr.vmem [resolvable:$true] %s107
      %110 = dma.vmem_to_hbm [thread:$0]  %s108, 16, %s1, [#allocation4]
    $region13: #{tpu_custom_call.1} parent=1 // pred_fallthru
      _
    // Predicated region
    $region14: #{tpu_custom_call.1} parent=1 // pred_check
      _
    $region15: #{tpu_custom_call.1} parent=1 // pred_check_branch
      %112 = sbr.rel (0) target = $region17
    $region16: #{tpu_custom_call.1} parent=1 // pred_region
      %113 = dma.done [#allocation4], 16
    $region17: #{tpu_custom_call.1} parent=1 // pred_fallthru
      _
    %114 = vsyncpa [#allocation3], 1
    %115 = vsyncpa [#allocation4], 1

</llo_original>
